<compile_context>
chip_gen: v7x
topology: tpu7x:2x2x1
jax: 0.10.0
libtpu: 0.0.40
codegen_flags: <defaults>
</compile_context>

<pallas_src>
import functools

import jax
import jax.numpy as jnp
from jax.experimental import pallas as pl
from jax.experimental.pallas import tpu as pltpu


def _graph_ant_kernel(anc_ref, adj_ref, base_ref, w1d_ref, w2b_ref, b2_ref,
                      cal_ref, std_ref,
                      sum_acc, sig_sum, sig_sq,
                      *, num_anchors, num_classes):
    step = pl.program_id(0)

    @pl.when(step == 0)
    def _():
        sum_acc[...] = jnp.zeros_like(sum_acc)
        sig_sum[...] = jnp.zeros_like(sig_sum)
        sig_sq[...] = jnp.zeros_like(sig_sq)

    anc = anc_ref[0]                          # [N, A_blk*F]  lane-packed anchors
    adj = adj_ref[...]                        # [N, N] dense normalized adjacency

    # Layer 1, anchor-dependent term only (anchor-invariant `base` precomputed):
    #   h_a = relu(base + (adj @ anc_a) @ (W1b - W1a))
    # Block-diagonal W1diff applies each anchor's slice independently.
    agg = jnp.dot(adj, anc, preferred_element_type=jnp.float32)          # [N, A_blk*F]
    z = jnp.dot(agg, w1d_ref[...], preferred_element_type=jnp.float32)   # [N, A_blk*H]
    h = jnp.maximum(base_ref[...] + z, 0.0)

    # Layer 2, reassociated: adj @ (h @ W2) + b2  -> N^2 matmul at width A_blk*C.
    hw = jnp.dot(h, w2b_ref[...], preferred_element_type=jnp.float32)    # [N, A_blk*C]
    o = jnp.dot(adj, hw, preferred_element_type=jnp.float32) + b2_ref[...]

    s = jax.nn.sigmoid(o)
    sum_acc[...] += o                         # lane-packed [N, A_blk*C] accumulators
    sig_sum[...] += s
    sig_sq[...] += s * s

    @pl.when(step == pl.num_programs(0) - 1)
    def _():
        C = num_classes
        a_blk = sum_acc.shape[1] // C
        tot = sum_acc[...]
        sg = sig_sum[...]
        sq = sig_sq[...]
        # Reduce the A_blk lane-packed per-anchor slots down to [N, C] (once).
        o_sum = tot[:, 0:C]
        s_sum = sg[:, 0:C]
        s_sq = sq[:, 0:C]
        for j in range(1, a_blk):
            o_sum = o_sum + tot[:, j * C:(j + 1) * C]
            s_sum = s_sum + sg[:, j * C:(j + 1) * C]
            s_sq = s_sq + sq[:, j * C:(j + 1) * C]

        a_f = jnp.asarray(num_anchors, jnp.float32)
        mu = o_sum / a_f
        mean_sig = s_sum / a_f
        # Unbiased variance over anchors of sigmoid(preds) (torch.std default).
        # Guard A == 1 (torch only warns): clamp denominator -> std = 0.
        denom = jnp.maximum(a_f - 1.0, 1.0)
        var = (s_sq - a_f * mean_sig * mean_sig) / denom
        std = jnp.sqrt(jnp.maximum(var, 0.0))
        c = jnp.mean(std, axis=1, keepdims=True)          # calibrate()
        std_ref[...] = std
        cal_ref[...] = mu / (1.0 + jnp.exp(c))


def _pick_anchor_block(num_anchors, hidden, max_lanes=512):
    """Largest divisor of A whose packed hidden width stays modest."""
    best = 1
    for cand in range(1, num_anchors + 1):
        if num_anchors % cand == 0 and cand * hidden <= max_lanes:
            best = cand
    return best


def graph_ant_forward(x, anchors, adj, w1, b1, w2, b2, *, return_std=True,
                      anchors_per_block=None):
    """x:[N,F], anchors:[A,N,F], adj:[N,N], w1:[2F,H], b1:[H], w2:[H,C], b2:[C]."""
    N, F = x.shape
    A = anchors.shape[0]
    H = w1.shape[1]
    C = w2.shape[1]

    a_blk = anchors_per_block or _pick_anchor_block(A, H)
    assert A % a_blk == 0, "anchors_per_block must divide num_anchors"
    G = A // a_blk                                     # grid steps

    # --- anchor-invariant precompute (plain XLA, once per call) -------------
    w1a = w1[:F]                                       # acts on (x - anchor)
    w1d = w1[F:] - w1a                                 # acts on anchor (folded)
    base = jnp.dot(adj, x) @ w1a + b1.reshape(1, H)    # [N, H]
    base_blk = jnp.tile(base, (1, a_blk))              # [N, A_blk*H]
    b2_blk = jnp.tile(b2.reshape(1, C), (1, a_blk))    # [1, A_blk*C]
    # Block-diagonal weight slabs so one 2-D matmul applies all A_blk anchors.
    eye = jnp.eye(a_blk, dtype=w1.dtype)
    w1d_blk = jnp.kron(eye, w1d)                       # [A_blk*F, A_blk*H]
    w2_blk = jnp.kron(eye, w2)                         # [A_blk*H, A_blk*C]
    # Lane-pack anchors per grid block: [G, N, A_blk*F].
    anc_packed = (anchors.reshape(G, a_blk, N, F)
                  .transpose(0, 2, 1, 3)
                  .reshape(G, N, a_blk * F))

    full2 = lambda n: (0, 0)
    grid_spec = pltpu.PrefetchScalarGridSpec(
        num_scalar_prefetch=0,
        grid=(G,),
        in_specs=[
            pl.BlockSpec((1, N, a_blk * F), lambda n: (n, 0, 0)),   # packed anchors
            pl.BlockSpec((N, N), full2),                            # adjacency
            pl.BlockSpec((N, a_blk * H), full2),                    # base (tiled)
            pl.BlockSpec((a_blk * F, a_blk * H), full2),            # block-diag W1diff
            pl.BlockSpec((a_blk * H, a_blk * C), full2),            # block-diag W2
            pl.BlockSpec((1, a_blk * C), full2),                    # b2 (tiled)
        ],
        out_specs=(
            pl.BlockSpec((N, C), full2),                            # calibrated
            pl.BlockSpec((N, C), full2),                            # std
        ),
        scratch_shapes=[
            pltpu.VMEM((N, a_blk * C), jnp.float32),                # sum of logits
            pltpu.VMEM((N, a_blk * C), jnp.float32),                # sum of sigmoid
            pltpu.VMEM((N, a_blk * C), jnp.float32),                # sum of sigmoid^2
        ],
    )

    kernel = functools.partial(_graph_ant_kernel, num_anchors=A, num_classes=C)
    cal, std = pl.pallas_call(
        kernel,
        out_shape=(
            jax.ShapeDtypeStruct((N, C), jnp.float32),
            jax.ShapeDtypeStruct((N, C), jnp.float32),
        ),
        grid_spec=grid_spec,
        compiler_params=pltpu.CompilerParams(
            dimension_semantics=("arbitrary",)),      # anchor axis is a reduction
    )(anc_packed, adj, base_blk, w1d_blk, w2_blk, b2_blk)

    if return_std:
        return cal, std
    # return_std=False path: reconstruct mu exactly from (cal, std); the kernel
    # never writes a dead mu output.
    c = jnp.mean(std, axis=1, keepdims=True)
    return cal * (1.0 + jnp.exp(c))


def _reference(x, anchors, adj, w1, b1, w2, b2):
    preds = []
    for n in range(anchors.shape[0]):
        anc = anchors[n]
        nf = jnp.concatenate([x - anc, anc], axis=1)
        h = jnp.maximum(adj @ nf @ w1 + b1, 0.0)
        preds.append(adj @ h @ w2 + b2)
    preds = jnp.stack(preds)
    mu = preds.mean(0)
    std = jnp.std(jax.nn.sigmoid(preds), axis=0, ddof=1)
    c = std.mean(axis=1, keepdims=True)
    return mu / (1.0 + jnp.exp(c)), std


if __name__ == "__main__":
    key = jax.random.PRNGKey(0)
    N, F, H, C, A = 8, 4, 32, 10, 4          # nodes, feats, hidden, classes, anchors
    k1, k2, k3, k4 = jax.random.split(key, 4)

    x = jax.random.normal(k1, (N, F), jnp.float32)

    # anchor distribution Normal(mean, std) per feature ("node" anchoring);
    # anchors drawn once here (glue) and consumed by the kernel.
    anc_mean = jnp.zeros((F,), jnp.float32)
    anc_std = jnp.ones((F,), jnp.float32)
    anchors = anc_mean + anc_std * jax.random.normal(k2, (A, N, F), jnp.float32)

    # deterministic synthetic parameters (first GNN layer takes 2*F inputs)
    w1 = 0.1 * jax.random.normal(k3, (2 * F, H), jnp.float32)
    b1 = jnp.zeros((H,), jnp.float32)
    w2 = 0.1 * jax.random.normal(k4, (H, C), jnp.float32)
    b2 = jnp.zeros((C,), jnp.float32)

    # small ring graph -> dense sym-normalized adjacency with self loops
    src = jnp.arange(N)
    dst = (src + 1) % N
    adj = jnp.zeros((N, N), jnp.float32).at[src, dst].set(1.0).at[dst, src].set(1.0)
    adj = adj + jnp.eye(N, dtype=jnp.float32)
    dinv = 1.0 / jnp.sqrt(adj.sum(axis=1))
    adj = adj * dinv[:, None] * dinv[None, :]

    cal, std = graph_ant_forward(x, anchors, adj, w1, b1, w2, b2, return_std=True)
    jax.block_until_ready((cal, std))

    cal_ref, std_ref = _reference(x, anchors, adj, w1, b1, w2, b2)
    assert jnp.allclose(cal, cal_ref, atol=1e-4, rtol=1e-4)
    assert jnp.allclose(std, std_ref, atol=1e-4, rtol=1e-4)

    # also exercise the return_std=False (mu) path
    mu = graph_ant_forward(x, anchors, adj, w1, b1, w2, b2, return_std=False)
    jax.block_until_ready(mu)
    mu_ref = jnp.stack([
        adj @ jnp.maximum(
            adj @ jnp.concatenate([x - anchors[n], anchors[n]], 1) @ w1 + b1, 0.0)
        @ w2 + b2 for n in range(A)]).mean(0)
    assert jnp.allclose(mu, mu_ref, atol=1e-4, rtol=1e-4)

    print("KERNEL_OK")
</pallas_src>

<mosaic_0001>
module attributes {stable_mosaic.version = 11 : i64} {
  func.func @_graph_ant_kernel(%arg0: i32, %arg1: memref<1x8x16xf32, #tpu.memory_space<vmem>>, %arg2: memref<8x8xf32, #tpu.memory_space<vmem>>, %arg3: memref<8x128xf32, #tpu.memory_space<vmem>>, %arg4: memref<16x128xf32, #tpu.memory_space<vmem>>, %arg5: memref<128x40xf32, #tpu.memory_space<vmem>>, %arg6: memref<1x40xf32, #tpu.memory_space<vmem>>, %arg7: memref<8x10xf32, #tpu.memory_space<vmem>>, %arg8: memref<8x10xf32, #tpu.memory_space<vmem>>, %arg9: memref<8x40xf32, #tpu.memory_space<vmem>>, %arg10: memref<8x40xf32, #tpu.memory_space<vmem>>, %arg11: memref<8x40xf32, #tpu.memory_space<vmem>>) attributes {dimension_semantics = [#tpu.dimension_semantics<arbitrary>], iteration_bounds = array<i64: 1>, scalar_prefetch = 0 : i64, scratch_operands = 3 : i64, tpu.core_type = #tpu.core_type<tc>, window_params = [{transform_indices = @transform_0, window_bounds = array<i64: 1, 8, 16>}, {pipeline_mode = #tpu.pipeline_mode<synchronous>, transform_indices = @transform_1, window_bounds = array<i64: 8, 8>}, {pipeline_mode = #tpu.pipeline_mode<synchronous>, transform_indices = @transform_2, window_bounds = array<i64: 8, 128>}, {pipeline_mode = #tpu.pipeline_mode<synchronous>, transform_indices = @transform_3, window_bounds = array<i64: 16, 128>}, {pipeline_mode = #tpu.pipeline_mode<synchronous>, transform_indices = @transform_4, window_bounds = array<i64: 128, 40>}, {pipeline_mode = #tpu.pipeline_mode<synchronous>, transform_indices = @transform_5, window_bounds = array<i64: 1, 40>}, {pipeline_mode = #tpu.pipeline_mode<synchronous>, transform_indices = @transform_6, window_bounds = array<i64: 8, 10>}, {pipeline_mode = #tpu.pipeline_mode<synchronous>, transform_indices = @transform_7, window_bounds = array<i64: 8, 10>}]} {
    %c0_i32 = arith.constant 0 : i32
    %0 = arith.cmpi eq, %arg0, %c0_i32 : i32
    %1 = arith.extui %0 : i1 to i32
    %c0_i32_0 = arith.constant 0 : i32
    %2 = arith.cmpi ne, %1, %c0_i32_0 : i32
    scf.if %2 {
      %cst_32 = arith.constant 0.000000e+00 : f32
      %37 = vector.broadcast %cst_32 : f32 to vector<8x40xf32>
      %c0_33 = arith.constant 0 : index
      %c0_34 = arith.constant 0 : index
      %38 = vector.load %arg9[%c0_33, %c0_34] : memref<8x40xf32, #tpu.memory_space<vmem>>, vector<8x40xf32>
      tpu.vector_store %arg9[%c0_33, %c0_34], %37 {strides = array<i32>} : memref<8x40xf32, #tpu.memory_space<vmem>>, vector<8x40xf32>,
      %cst_35 = arith.constant 0.000000e+00 : f32
      %39 = vector.broadcast %cst_35 : f32 to vector<8x40xf32>
      %c0_36 = arith.constant 0 : index
      %c0_37 = arith.constant 0 : index
      %40 = vector.load %arg10[%c0_36, %c0_37] : memref<8x40xf32, #tpu.memory_space<vmem>>, vector<8x40xf32>
      tpu.vector_store %arg10[%c0_36, %c0_37], %39 {strides = array<i32>} : memref<8x40xf32, #tpu.memory_space<vmem>>, vector<8x40xf32>,
      %cst_38 = arith.constant 0.000000e+00 : f32
      %41 = vector.broadcast %cst_38 : f32 to vector<8x40xf32>
      %c0_39 = arith.constant 0 : index
      %c0_40 = arith.constant 0 : index
      %42 = vector.load %arg11[%c0_39, %c0_40] : memref<8x40xf32, #tpu.memory_space<vmem>>, vector<8x40xf32>
      tpu.vector_store %arg11[%c0_39, %c0_40], %41 {strides = array<i32>} : memref<8x40xf32, #tpu.memory_space<vmem>>, vector<8x40xf32>,
    } else {
    }
    %c0 = arith.constant 0 : index
    %c0_1 = arith.constant 0 : index
    %c0_2 = arith.constant 0 : index
    %3 = vector.load %arg1[%c0, %c0_1, %c0_2] : memref<1x8x16xf32, #tpu.memory_space<vmem>>, vector<1x8x16xf32>
    %4 = vector.shape_cast %3 : vector<1x8x16xf32> to vector<8x16xf32>
    %c0_3 = arith.constant 0 : index
    %c0_4 = arith.constant 0 : index
    %5 = vector.load %arg2[%c0_3, %c0_4] : memref<8x8xf32, #tpu.memory_space<vmem>>, vector<8x8xf32>
    %cst = arith.constant dense<0.000000e+00> : vector<8x16xf32>
    %6 = tpu.matmul %5, %4, %cst {dimension_numbers = #tpu.dot_dimension_numbers<[1], [0], [0], [1], [0, 0, 1, 1], [], []>} : vector<8x8xf32>, vector<8x16xf32>, vector<8x16xf32> -> vector<8x16xf32>
    %c0_5 = arith.constant 0 : index
    %c0_6 = arith.constant 0 : index
    %7 = vector.load %arg4[%c0_5, %c0_6] : memref<16x128xf32, #tpu.memory_space<vmem>>, vector<16x128xf32>
    %cst_7 = arith.constant dense<0.000000e+00> : vector<8x128xf32>
    %8 = tpu.matmul %6, %7, %cst_7 {dimension_numbers = #tpu.dot_dimension_numbers<[1], [0], [0], [1], [0, 0, 1, 1], [], []>} : vector<8x16xf32>, vector<16x128xf32>, vector<8x128xf32> -> vector<8x128xf32>
    %c0_8 = arith.constant 0 : index
    %c0_9 = arith.constant 0 : index
    %9 = vector.load %arg3[%c0_8, %c0_9] : memref<8x128xf32, #tpu.memory_space<vmem>>, vector<8x128xf32>
    %10 = arith.addf %9, %8 : vector<8x128xf32>
    %cst_10 = arith.constant 0.000000e+00 : f32
    %11 = vector.broadcast %cst_10 : f32 to vector<8x128xf32>
    %12 = arith.maximumf %10, %11 : vector<8x128xf32>
    %c0_11 = arith.constant 0 : index
    %c0_12 = arith.constant 0 : index
    %13 = vector.load %arg5[%c0_11, %c0_12] : memref<128x40xf32, #tpu.memory_space<vmem>>, vector<128x40xf32>
    %cst_13 = arith.constant dense<0.000000e+00> : vector<8x40xf32>
    %14 = tpu.matmul %12, %13, %cst_13 {dimension_numbers = #tpu.dot_dimension_numbers<[1], [0], [0], [1], [0, 0, 1, 1], [], []>} : vector<8x128xf32>, vector<128x40xf32>, vector<8x40xf32> -> vector<8x40xf32>
    %cst_14 = arith.constant dense<0.000000e+00> : vector<8x40xf32>
    %15 = tpu.matmul %5, %14, %cst_14 {dimension_numbers = #tpu.dot_dimension_numbers<[1], [0], [0], [1], [0, 0, 1, 1], [], []>} : vector<8x8xf32>, vector<8x40xf32>, vector<8x40xf32> -> vector<8x40xf32>
    %c0_15 = arith.constant 0 : index
    %c0_16 = arith.constant 0 : index
    %16 = vector.load %arg6[%c0_15, %c0_16] : memref<1x40xf32, #tpu.memory_space<vmem>>, vector<1x40xf32>
    %17 = vector.broadcast %16 : vector<1x40xf32> to vector<8x40xf32>
    %18 = arith.addf %15, %17 : vector<8x40xf32>
    %19 = arith.negf %18 : vector<8x40xf32>
    %20 = math.exp %19 : vector<8x40xf32>
    %cst_17 = arith.constant 1.000000e+00 : f32
    %21 = vector.broadcast %cst_17 : f32 to vector<8x40xf32>
    %22 = arith.addf %21, %20 : vector<8x40xf32>
    %23 = arith.divf %21, %22 : vector<8x40xf32>
    %c0_18 = arith.constant 0 : index
    %c0_19 = arith.constant 0 : index
    %24 = vector.load %arg9[%c0_18, %c0_19] : memref<8x40xf32, #tpu.memory_space<vmem>>, vector<8x40xf32>
    %25 = arith.addf %24, %18 : vector<8x40xf32>
    %c0_20 = arith.constant 0 : index
    %c0_21 = arith.constant 0 : index
    %26 = vector.load %arg9[%c0_20, %c0_21] : memref<8x40xf32, #tpu.memory_space<vmem>>, vector<8x40xf32>
    tpu.vector_store %arg9[%c0_20, %c0_21], %25 {strides = array<i32>} : memref<8x40xf32, #tpu.memory_space<vmem>>, vector<8x40xf32>,
    %c0_22 = arith.constant 0 : index
    %c0_23 = arith.constant 0 : index
    %27 = vector.load %arg10[%c0_22, %c0_23] : memref<8x40xf32, #tpu.memory_space<vmem>>, vector<8x40xf32>
    %28 = arith.addf %27, %23 : vector<8x40xf32>
    %c0_24 = arith.constant 0 : index
    %c0_25 = arith.constant 0 : index
    %29 = vector.load %arg10[%c0_24, %c0_25] : memref<8x40xf32, #tpu.memory_space<vmem>>, vector<8x40xf32>
    tpu.vector_store %arg10[%c0_24, %c0_25], %28 {strides = array<i32>} : memref<8x40xf32, #tpu.memory_space<vmem>>, vector<8x40xf32>,
    %c0_26 = arith.constant 0 : index
    %c0_27 = arith.constant 0 : index
    %30 = vector.load %arg11[%c0_26, %c0_27] : memref<8x40xf32, #tpu.memory_space<vmem>>, vector<8x40xf32>
    %31 = arith.mulf %23, %23 : vector<8x40xf32>
    %32 = arith.addf %30, %31 : vector<8x40xf32>
    %c0_28 = arith.constant 0 : index
    %c0_29 = arith.constant 0 : index
    %33 = vector.load %arg11[%c0_28, %c0_29] : memref<8x40xf32, #tpu.memory_space<vmem>>, vector<8x40xf32>
    tpu.vector_store %arg11[%c0_28, %c0_29], %32 {strides = array<i32>} : memref<8x40xf32, #tpu.memory_space<vmem>>, vector<8x40xf32>,
    %c0_i32_30 = arith.constant 0 : i32
    %34 = arith.cmpi eq, %arg0, %c0_i32_30 : i32
    %35 = arith.extui %34 : i1 to i32
    %c0_i32_31 = arith.constant 0 : i32
    %36 = arith.cmpi ne, %35, %c0_i32_31 : i32
    scf.if %36 {
      %c0_32 = arith.constant 0 : index
      %c0_33 = arith.constant 0 : index
      %37 = vector.load %arg9[%c0_32, %c0_33] : memref<8x40xf32, #tpu.memory_space<vmem>>, vector<8x40xf32>
      %c0_34 = arith.constant 0 : index
      %c0_35 = arith.constant 0 : index
      %38 = vector.load %arg10[%c0_34, %c0_35] : memref<8x40xf32, #tpu.memory_space<vmem>>, vector<8x40xf32>
      %c0_36 = arith.constant 0 : index
      %c0_37 = arith.constant 0 : index
      %39 = vector.load %arg11[%c0_36, %c0_37] : memref<8x40xf32, #tpu.memory_space<vmem>>, vector<8x40xf32>
      %40 = vector.extract_strided_slice %37 {offsets = [0, 0], sizes = [8, 10], strides = [1, 1]} : vector<8x40xf32> to vector<8x10xf32>
      %41 = vector.extract_strided_slice %38 {offsets = [0, 0], sizes = [8, 10], strides = [1, 1]} : vector<8x40xf32> to vector<8x10xf32>
      %42 = vector.extract_strided_slice %39 {offsets = [0, 0], sizes = [8, 10], strides = [1, 1]} : vector<8x40xf32> to vector<8x10xf32>
      %43 = vector.extract_strided_slice %37 {offsets = [0, 10], sizes = [8, 10], strides = [1, 1]} : vector<8x40xf32> to vector<8x10xf32>
      %44 = arith.addf %40, %43 : vector<8x10xf32>
      %45 = vector.extract_strided_slice %38 {offsets = [0, 10], sizes = [8, 10], strides = [1, 1]} : vector<8x40xf32> to vector<8x10xf32>
      %46 = arith.addf %41, %45 : vector<8x10xf32>
      %47 = vector.extract_strided_slice %39 {offsets = [0, 10], sizes = [8, 10], strides = [1, 1]} : vector<8x40xf32> to vector<8x10xf32>
      %48 = arith.addf %42, %47 : vector<8x10xf32>
      %49 = vector.extract_strided_slice %37 {offsets = [0, 20], sizes = [8, 10], strides = [1, 1]} : vector<8x40xf32> to vector<8x10xf32>
      %50 = arith.addf %44, %49 : vector<8x10xf32>
      %51 = vector.extract_strided_slice %38 {offsets = [0, 20], sizes = [8, 10], strides = [1, 1]} : vector<8x40xf32> to vector<8x10xf32>
      %52 = arith.addf %46, %51 : vector<8x10xf32>
      %53 = vector.extract_strided_slice %39 {offsets = [0, 20], sizes = [8, 10], strides = [1, 1]} : vector<8x40xf32> to vector<8x10xf32>
      %54 = arith.addf %48, %53 : vector<8x10xf32>
      %55 = vector.extract_strided_slice %37 {offsets = [0, 30], sizes = [8, 10], strides = [1, 1]} : vector<8x40xf32> to vector<8x10xf32>
      %56 = arith.addf %50, %55 : vector<8x10xf32>
      %57 = vector.extract_strided_slice %38 {offsets = [0, 30], sizes = [8, 10], strides = [1, 1]} : vector<8x40xf32> to vector<8x10xf32>
      %58 = arith.addf %52, %57 : vector<8x10xf32>
      %59 = vector.extract_strided_slice %39 {offsets = [0, 30], sizes = [8, 10], strides = [1, 1]} : vector<8x40xf32> to vector<8x10xf32>
      %60 = arith.addf %54, %59 : vector<8x10xf32>
      %cst_38 = arith.constant 4.000000e+00 : f32
      %61 = vector.broadcast %cst_38 : f32 to vector<8x10xf32>
      %62 = arith.divf %56, %61 : vector<8x10xf32>
      %cst_39 = arith.constant 4.000000e+00 : f32
      %63 = vector.broadcast %cst_39 : f32 to vector<8x10xf32>
      %64 = arith.divf %58, %63 : vector<8x10xf32>
      %cst_40 = arith.constant 4.000000e+00 : f32
      %cst_41 = arith.constant 1.000000e+00 : f32
      %65 = arith.subf %cst_40, %cst_41 : f32
      %cst_42 = arith.constant 1.000000e+00 : f32
      %66 = arith.maximumf %65, %cst_42 : f32
      %cst_43 = arith.constant 4.000000e+00 : f32
      %67 = vector.broadcast %cst_43 : f32 to vector<8x10xf32>
      %68 = arith.mulf %67, %64 : vector<8x10xf32>
      %69 = arith.mulf %68, %64 : vector<8x10xf32>
      %70 = arith.subf %60, %69 : vector<8x10xf32>
      %71 = vector.broadcast %66 : f32 to vector<8x10xf32>
      %72 = arith.divf %70, %71 : vector<8x10xf32>
      %cst_44 = arith.constant 0.000000e+00 : f32
      %73 = vector.broadcast %cst_44 : f32 to vector<8x10xf32>
      %74 = arith.maximumf %72, %73 : vector<8x10xf32>
      %75 = math.sqrt %74 : vector<8x10xf32>
      %cst_45 = arith.constant dense<0.000000e+00> : vector<8xf32>
      %76 = vector.multi_reduction <add>, %75, %cst_45 [1] : vector<8x10xf32> to vector<8xf32>
      %77 = vector.shape_cast %76 : vector<8xf32> to vector<8x1xf32>
      %cst_46 = arith.constant 1.000000e+01 : f32
      %78 = vector.broadcast %cst_46 : f32 to vector<8x1xf32>
      %79 = arith.divf %77, %78 : vector<8x1xf32>
      %c0_47 = arith.constant 0 : index
      %c0_48 = arith.constant 0 : index
      %80 = vector.load %arg8[%c0_47, %c0_48] : memref<8x10xf32, #tpu.memory_space<vmem>>, vector<8x10xf32>
      tpu.vector_store %arg8[%c0_47, %c0_48], %75 {strides = array<i32>} : memref<8x10xf32, #tpu.memory_space<vmem>>, vector<8x10xf32>,
      %81 = math.exp %79 : vector<8x1xf32>
      %cst_49 = arith.constant 1.000000e+00 : f32
      %82 = vector.broadcast %cst_49 : f32 to vector<8x1xf32>
      %83 = arith.addf %82, %81 : vector<8x1xf32>
      %84 = vector.broadcast %83 : vector<8x1xf32> to vector<8x10xf32>
      %85 = arith.divf %62, %84 : vector<8x10xf32>
      %c0_50 = arith.constant 0 : index
      %c0_51 = arith.constant 0 : index
      %86 = vector.load %arg7[%c0_50, %c0_51] : memref<8x10xf32, #tpu.memory_space<vmem>>, vector<8x10xf32>
      tpu.vector_store %arg7[%c0_50, %c0_51], %85 {strides = array<i32>} : memref<8x10xf32, #tpu.memory_space<vmem>>, vector<8x10xf32>,
    } else {
    }
    return
  }
  func.func @transform_0(%arg0: i32) -> (i32, i32, i32) {
    %c0_i32 = arith.constant 0 : i32
    %c0_i32_0 = arith.constant 0 : i32
    %c0_i32_1 = arith.constant 0 : i32
    return %arg0, %c0_i32, %c0_i32_0 : i32, i32, i32
  }
  func.func @transform_1(%arg0: i32) -> (i32, i32) {
    %c0_i32 = arith.constant 0 : i32
    %c0_i32_0 = arith.constant 0 : i32
    %c0_i32_1 = arith.constant 0 : i32
    return %c0_i32, %c0_i32_0 : i32, i32
  }
  func.func @transform_2(%arg0: i32) -> (i32, i32) {
    %c0_i32 = arith.constant 0 : i32
    %c0_i32_0 = arith.constant 0 : i32
    %c0_i32_1 = arith.constant 0 : i32
    return %c0_i32, %c0_i32_0 : i32, i32
  }
  func.func @transform_3(%arg0: i32) -> (i32, i32) {
    %c0_i32 = arith.constant 0 : i32
    %c0_i32_0 = arith.constant 0 : i32
    %c0_i32_1 = arith.constant 0 : i32
    return %c0_i32, %c0_i32_0 : i32, i32
  }
  func.func @transform_4(%arg0: i32) -> (i32, i32) {
    %c0_i32 = arith.constant 0 : i32
    %c0_i32_0 = arith.constant 0 : i32
    %c0_i32_1 = arith.constant 0 : i32
    return %c0_i32, %c0_i32_0 : i32, i32
  }
  func.func @transform_5(%arg0: i32) -> (i32, i32) {
    %c0_i32 = arith.constant 0 : i32
    %c0_i32_0 = arith.constant 0 : i32
    %c0_i32_1 = arith.constant 0 : i32
    return %c0_i32, %c0_i32_0 : i32, i32
  }
  func.func @transform_6(%arg0: i32) -> (i32, i32) {
    %c0_i32 = arith.constant 0 : i32
    %c0_i32_0 = arith.constant 0 : i32
    %c0_i32_1 = arith.constant 0 : i32
    return %c0_i32, %c0_i32_0 : i32, i32
  }
  func.func @transform_7(%arg0: i32) -> (i32, i32) {
    %c0_i32 = arith.constant 0 : i32
    %c0_i32_0 = arith.constant 0 : i32
    %c0_i32_1 = arith.constant 0 : i32
    return %c0_i32, %c0_i32_0 : i32, i32
  }
}

</mosaic_0001>

<llo_original>
// kernel: tpu_custom_call.1
$region0: #{tpu_custom_call.1}
  #allocation0 [shape = 'u32[]', space=smem, size = 0x4, offset = 0x4, fixed_abs, tag = 'smem constant byte address 0x4 - core index']
  #allocation1 [shape = 'u32[144,128]{1,0:T(1,128)}', space=vmem, size = 0x12000, scoped, tag = 'internal scratch']
  #allocation2 [shape = 'f32[8,40]{1,0:T(8,128)}', space=vmem, size = 0x1000, scoped, tag = 'scratch operand']
  #allocation3 [shape = 'f32[8,40]{1,0:T(8,128)}', space=vmem, size = 0x1000, scoped, tag = 'scratch operand']
  #allocation4 [shape = 'f32[8,40]{1,0:T(8,128)}', space=vmem, size = 0x1000, scoped, tag = 'scratch operand']
  %s0 = inlined_call_operand.vmem [shape: f32[1,8,16], index: 0, kind: input, shape index: {}]
  %s1 = inlined_call_operand.vmem [shape: f32[8,8], index: 1, kind: input, shape index: {}]
  %s2 = inlined_call_operand.vmem [shape: f32[8,128], index: 2, kind: input, shape index: {}]
  %s3 = inlined_call_operand.vmem [shape: f32[16,128], index: 3, kind: input, shape index: {}]
  %s4 = inlined_call_operand.vmem [shape: f32[128,40], index: 4, kind: input, shape index: {}]
  %s5 = inlined_call_operand.vmem [shape: f32[1,40], index: 5, kind: input, shape index: {}]
  %s6 = inlined_call_operand.hbm [shape: f32[8,10], index: 6, kind: output, shape index: {0}]
  %s7 = inlined_call_operand.hbm [shape: f32[8,10], index: 7, kind: output, shape index: {1}]
  %8 = xla_tuple %s6, %s7
  %s9 = sld [smem:[#allocation0]]
  $region50: #{tpu_custom_call.1} parent=0
    _
  %s11 = ssub.s32 1, %s9
  %s12 = scalar_select 0, %s11, %s9
  $region1: #{tpu_custom_call.1} parent=0
    #allocation5 [shape = 'u8[4096]{0}', space=vmem, size = 0x1000, scoped, tag = 'output window, operand 0, single buffered']
    #allocation6 [shape = 's32[1]{0}', space=sflag, size = 0x4, scoped, tag = 'scoped memory for tpu_custom_call.1']
    #allocation7 [shape = 'u8[4096]{0}', space=vmem, size = 0x1000, scoped, tag = 'output window, operand 1, single buffered']
    #allocation8 [shape = 's32[1]{0}', space=sflag, size = 0x4, scoped, tag = 'scoped memory for tpu_custom_call.1']
    %13 = vsyncpa [#allocation6], 0
    %14 = vsyncpa [#allocation8], 0
    // Predicated region
    $region2: #{tpu_custom_call.1} parent=1 // pred_check
      _
    $region3: #{tpu_custom_call.1} parent=1 // pred_check_branch
      %16 = sbr.rel (0) target = $region5
    $region4: #{tpu_custom_call.1} parent=1 // pred_region
      _
    $region5: #{tpu_custom_call.1} parent=1 // pred_fallthru
      _
    // Predicated region
    $region6: #{tpu_custom_call.1} parent=1 // pred_check
      _
    $region7: #{tpu_custom_call.1} parent=1 // pred_check_branch
      %18 = sbr.rel (0) target = $region9
    $region8: #{tpu_custom_call.1} parent=1 // pred_region
      _
    $region9: #{tpu_custom_call.1} parent=1 // pred_fallthru
      _
    // Predicated region
    $region10: #{tpu_custom_call.1} parent=1 // pred_check
      _
    $region11: #{tpu_custom_call.1} parent=1 // pred_check_branch
      %20 = sbr.rel (0) target = $region13
    $region12: #{tpu_custom_call.1} parent=1 // pred_region
      _
    $region13: #{tpu_custom_call.1} parent=1 // pred_fallthru
      _
    // Predicated region
    $region14: #{tpu_custom_call.1} parent=1 // pred_check
      _
    $region15: #{tpu_custom_call.1} parent=1 // pred_check_branch
      %22 = sbr.rel (0) target = $region17
    $region16: #{tpu_custom_call.1} parent=1 // pred_region
      _
    $region17: #{tpu_custom_call.1} parent=1 // pred_fallthru
      _
    // Predicated region
    $region18: #{tpu_custom_call.1} parent=1 // pred_check
      _
    $region19: #{tpu_custom_call.1} parent=1 // pred_check_branch
      %24 = sbr.rel (0) target = $region21
    $region20: #{tpu_custom_call.1} parent=1 // pred_region
      _
    $region21: #{tpu_custom_call.1} parent=1 // pred_fallthru
      _
    // Predicated region
    $region22: #{tpu_custom_call.1} parent=1 // pred_check
      _
    $region23: #{tpu_custom_call.1} parent=1 // pred_check_branch
      %26 = sbr.rel (0) target = $region25
    $region24: #{tpu_custom_call.1} parent=1 // pred_region
      _
    $region25: #{tpu_custom_call.1} parent=1 // pred_fallthru
      _
    %p27 = scmp.eq.s32.totalorder 0, 0
    // Predicated region
    $region26: #{tpu_custom_call.1} parent=1 // pred_check
      %p28 = pneg %p27
    $region27: #{tpu_custom_call.1} parent=1 // pred_check_branch
      %30 = sbr.rel (%p28) target = $region29
    $region28: #{tpu_custom_call.1} parent=1 // pred_region
      %vm31 = vcmask 326656
      %32 = vst.msk [vmem:[#allocation2] sm:$0xff] %vm31, 0.0
      %33 = vst.msk [vmem:[#allocation3] sm:$0xff] %vm31, 0.0
      %34 = vst.msk [vmem:[#allocation4] sm:$0xff] %vm31, 0.0
    $region29: #{tpu_custom_call.1} parent=1 // pred_fallthru
      _
    %v35 = vld [vmem:[%s0] sm:$0xff]
    %v36 = vld [vmem:[%s1] sm:$0xff]
    %vm37 = vcmask 64512
    %v39 = vsel %vm37, %v36, 0
    %41 = vmatprep.subr.mxu0 0.0
    %42 = vmatpush1.msra.mxu0 %v35
    %43 = vmatprep.subr.mxu0 0.0
    %44 = vmatpush1.msra.mxu0 0.0
    %45 = vmatprep.subr.mxu0 0.0
    %46 = vmatpush1.msra.mxu0 0.0
    %47 = vmatprep.subr.mxu0 0.0
    %48 = vmatpush1.msra.mxu0 0.0
    %49 = vmatprep.subr.mxu0 0.0
    %50 = vmatpush1.msra.mxu0 0.0
    %51 = vmatprep.subr.mxu0 0.0
    %52 = vmatpush1.msra.mxu0 0.0
    %53 = vmatprep.subr.mxu0 0.0
    %54 = vmatpush1.msra.mxu0 0.0
    %55 = vmatprep.subr.mxu0 0.0
    %56 = vmatpush1.msra.mxu0 0.0
    %57 = vmatprep.subr.mxu0 0.0
    %58 = vmatpush1.msra.mxu0 0.0
    %59 = vmatprep.subr.mxu0 0.0
    %60 = vmatpush1.msra.mxu0 0.0
    %61 = vmatprep.subr.mxu0 0.0
    %62 = vmatpush1.msra.mxu0 0.0
    %63 = vmatprep.subr.mxu0 0.0
    %64 = vmatpush1.msra.mxu0 0.0
    %65 = vmatprep.subr.mxu0 0.0
    %66 = vmatpush1.msra.mxu0 0.0
    %67 = vmatprep.subr.mxu0 0.0
    %68 = vmatpush1.msra.mxu0 0.0
    %69 = vmatprep.subr.mxu0 0.0
    %70 = vmatpush1.msra.mxu0 0.0
    %71 = vmatprep.subr.mxu0 0.0
    %72 = vmatpush1.msra.mxu0 0.0
    %73 = vmatprep.subr.mxu0 0.0
    %74 = vmatpush1.msra.mxu0 0.0
    %75 = vmatprep.subr.mxu0 0.0
    %76 = vmatpush1.msra.mxu0 0.0
    %77 = vmatprep.subr.mxu0 0.0
    %78 = vmatpush1.msra.mxu0 0.0
    %79 = vmatprep.subr.mxu0 0.0
    %80 = vmatpush1.msra.mxu0 0.0
    %81 = vmatprep.subr.mxu0 0.0
    %82 = vmatpush1.msra.mxu0 0.0
    %83 = vmatprep.subr.mxu0 0.0
    %84 = vmatpush1.msra.mxu0 0.0
    %85 = vmatprep.subr.mxu0 0.0
    %86 = vmatpush1.msra.mxu0 0.0
    %87 = vmatprep.subr.mxu0 0.0
    %88 = vmatpush1.msra.mxu0 0.0
    %89 = vmatprep.subr.mxu0 0.0
    %90 = vmatpush1.msra.mxu0 0.0
    %91 = vmatprep.subr.mxu0 0.0
    %92 = vmatpush1.msra.mxu0 0.0
    %93 = vmatprep.subr.mxu0 0.0
    %94 = vmatpush1.msra.mxu0 0.0
    %95 = vmatprep.subr.mxu0 0.0
    %96 = vmatpush1.msra.mxu0 0.0
    %97 = vmatprep.subr.mxu0 0.0
    %98 = vmatpush1.msra.mxu0 0.0
    %99 = vmatprep.subr.mxu0 0.0
    %100 = vmatpush1.msra.mxu0 0.0
    %101 = vmatprep.subr.mxu0 0.0
    %102 = vmatpush1.msra.mxu0 0.0
    %103 = vmatprep.subr.mxu0 0.0
    %104 = vmatpush1.msra.mxu0 0.0
    %105 = vmatprep.mubr.f32.mxu0 0.0
    %106 = vmatmul.mubr.f32.gmra.mrb[0].mxu0 %v39
    %v107 = vpop.f32.mrb[0].mxu0
    %v108 = vadd.f32 0.0, %v107
    %v109 = vpop.f32.mrb[0].mxu0
    %110 = vdwg.mxu0
    %v111 = vld [vmem:[%s3] sm:$0xff]
    %v112 = vld [vmem:[%s3 + $0x8] sm:$0xff]
    %vm113 = vcmask 130048
    %v115 = vsel %vm113, %v108, 0
    %117 = vmatprep.subr.mxu0 0.0
    %118 = vmatpush1.msra.mxu0 %v111
    %119 = vmatprep.subr.mxu0 0.0
    %120 = vmatpush1.msra.mxu0 %v112
    %121 = vmatprep.subr.mxu0 0.0
    %122 = vmatpush1.msra.mxu0 0.0
    %123 = vmatprep.subr.mxu0 0.0
    %124 = vmatpush1.msra.mxu0 0.0
    %125 = vmatprep.subr.mxu0 0.0
    %126 = vmatpush1.msra.mxu0 0.0
    %127 = vmatprep.subr.mxu0 0.0
    %128 = vmatpush1.msra.mxu0 0.0
    %129 = vmatprep.subr.mxu0 0.0
    %130 = vmatpush1.msra.mxu0 0.0
    %131 = vmatprep.subr.mxu0 0.0
    %132 = vmatpush1.msra.mxu0 0.0
    %133 = vmatprep.subr.mxu0 0.0
    %134 = vmatpush1.msra.mxu0 0.0
    %135 = vmatprep.subr.mxu0 0.0
    %136 = vmatpush1.msra.mxu0 0.0
    %137 = vmatprep.subr.mxu0 0.0
    %138 = vmatpush1.msra.mxu0 0.0
    %139 = vmatprep.subr.mxu0 0.0
    %140 = vmatpush1.msra.mxu0 0.0
    %141 = vmatprep.subr.mxu0 0.0
    %142 = vmatpush1.msra.mxu0 0.0
    %143 = vmatprep.subr.mxu0 0.0
    %144 = vmatpush1.msra.mxu0 0.0
    %145 = vmatprep.subr.mxu0 0.0
    %146 = vmatpush1.msra.mxu0 0.0
    %147 = vmatprep.subr.mxu0 0.0
    %148 = vmatpush1.msra.mxu0 0.0
    %149 = vmatprep.subr.mxu0 0.0
    %150 = vmatpush1.msra.mxu0 0.0
    %151 = vmatprep.subr.mxu0 0.0
    %152 = vmatpush1.msra.mxu0 0.0
    %153 = vmatprep.subr.mxu0 0.0
    %154 = vmatpush1.msra.mxu0 0.0
    %155 = vmatprep.subr.mxu0 0.0
    %156 = vmatpush1.msra.mxu0 0.0
    %157 = vmatprep.subr.mxu0 0.0
    %158 = vmatpush1.msra.mxu0 0.0
    %159 = vmatprep.subr.mxu0 0.0
    %160 = vmatpush1.msra.mxu0 0.0
    %161 = vmatprep.subr.mxu0 0.0
    %162 = vmatpush1.msra.mxu0 0.0
    %163 = vmatprep.subr.mxu0 0.0
    %164 = vmatpush1.msra.mxu0 0.0
    %165 = vmatprep.subr.mxu0 0.0
    %166 = vmatpush1.msra.mxu0 0.0
    %167 = vmatprep.subr.mxu0 0.0
    %168 = vmatpush1.msra.mxu0 0.0
    %169 = vmatprep.subr.mxu0 0.0
    %170 = vmatpush1.msra.mxu0 0.0
    %171 = vmatprep.subr.mxu0 0.0
    %172 = vmatpush1.msra.mxu0 0.0
    %173 = vmatprep.subr.mxu0 0.0
    %174 = vmatpush1.msra.mxu0 0.0
    %175 = vmatprep.subr.mxu0 0.0
    %176 = vmatpush1.msra.mxu0 0.0
    %177 = vmatprep.subr.mxu0 0.0
    %178 = vmatpush1.msra.mxu0 0.0
    %179 = vmatprep.subr.mxu0 0.0
    %180 = vmatpush1.msra.mxu0 0.0
    %181 = vmatprep.mubr.f32.mxu0 0.0
    %182 = vmatmul.mubr.f32.gmra.mrb[0].mxu0 %v115
    %v183 = vpop.f32.mrb[0].mxu0
    %v184 = vadd.f32 0.0, %v183
    %v185 = vpop.f32.mrb[0].mxu0
    %186 = vdwg.mxu0
    %v187 = vld [vmem:[%s2] sm:$0xff]
    %v188 = vadd.f32 %v187, %v184
    %v189 = vmax.f32 %v188, 0.0
    %v190 = vld [vmem:[%s4] sm:$0xff]
    %v191 = vld [vmem:[%s4 + $0x8] sm:$0xff]
    %v192 = vld [vmem:[%s4 + $0x10] sm:$0xff]
    %v193 = vld [vmem:[%s4 + $0x18] sm:$0xff]
    %v194 = vld [vmem:[%s4 + $0x20] sm:$0xff]
    %v195 = vld [vmem:[%s4 + $0x28] sm:$0xff]
    %v196 = vld [vmem:[%s4 + $0x30] sm:$0xff]
    %v197 = vld [vmem:[%s4 + $0x38] sm:$0xff]
    %v198 = vld [vmem:[%s4 + $0x40] sm:$0xff]
    %v199 = vld [vmem:[%s4 + $0x48] sm:$0xff]
    %v200 = vld [vmem:[%s4 + $0x50] sm:$0xff]
    %v201 = vld [vmem:[%s4 + $0x58] sm:$0xff]
    %v202 = vld [vmem:[%s4 + $0x60] sm:$0xff]
    %v203 = vld [vmem:[%s4 + $0x68] sm:$0xff]
    %v204 = vld [vmem:[%s4 + $0x70] sm:$0xff]
    %v205 = vld [vmem:[%s4 + $0x78] sm:$0xff]
    %206 = vmatprep.subr.mxu0 0.0
    %207 = vmatpush1.msra.mxu0 %v190
    %208 = vmatprep.subr.mxu0 0.0
    %209 = vmatpush1.msra.mxu0 %v191
    %210 = vmatprep.subr.mxu0 0.0
    %211 = vmatpush1.msra.mxu0 %v192
    %212 = vmatprep.subr.mxu0 0.0
    %213 = vmatpush1.msra.mxu0 %v193
    %214 = vmatprep.subr.mxu0 0.0
    %215 = vmatpush1.msra.mxu0 %v194
    %216 = vmatprep.subr.mxu0 0.0
    %217 = vmatpush1.msra.mxu0 %v195
    %218 = vmatprep.subr.mxu0 0.0
    %219 = vmatpush1.msra.mxu0 %v196
    %220 = vmatprep.subr.mxu0 0.0
    %221 = vmatpush1.msra.mxu0 %v197
    %222 = vmatprep.subr.mxu0 0.0
    %223 = vmatpush1.msra.mxu0 %v198
    %224 = vmatprep.subr.mxu0 0.0
    %225 = vmatpush1.msra.mxu0 %v199
    %226 = vmatprep.subr.mxu0 0.0
    %227 = vmatpush1.msra.mxu0 %v200
    %228 = vmatprep.subr.mxu0 0.0
    %229 = vmatpush1.msra.mxu0 %v201
    %230 = vmatprep.subr.mxu0 0.0
    %231 = vmatpush1.msra.mxu0 %v202
    %232 = vmatprep.subr.mxu0 0.0
    %233 = vmatpush1.msra.mxu0 %v203
    %234 = vmatprep.subr.mxu0 0.0
    %235 = vmatpush1.msra.mxu0 %v204
    %236 = vmatprep.subr.mxu0 0.0
    %237 = vmatpush1.msra.mxu0 %v205
    %238 = vmatprep.subr.mxu0 0.0
    %239 = vmatpush1.msra.mxu0 0.0
    %240 = vmatprep.subr.mxu0 0.0
    %241 = vmatpush1.msra.mxu0 0.0
    %242 = vmatprep.subr.mxu0 0.0
    %243 = vmatpush1.msra.mxu0 0.0
    %244 = vmatprep.subr.mxu0 0.0
    %245 = vmatpush1.msra.mxu0 0.0
    %246 = vmatprep.subr.mxu0 0.0
    %247 = vmatpush1.msra.mxu0 0.0
    %248 = vmatprep.subr.mxu0 0.0
    %249 = vmatpush1.msra.mxu0 0.0
    %250 = vmatprep.subr.mxu0 0.0
    %251 = vmatpush1.msra.mxu0 0.0
    %252 = vmatprep.subr.mxu0 0.0
    %253 = vmatpush1.msra.mxu0 0.0
    %254 = vmatprep.subr.mxu0 0.0
    %255 = vmatpush1.msra.mxu0 0.0
    %256 = vmatprep.subr.mxu0 0.0
    %257 = vmatpush1.msra.mxu0 0.0
    %258 = vmatprep.subr.mxu0 0.0
    %259 = vmatpush1.msra.mxu0 0.0
    %260 = vmatprep.subr.mxu0 0.0
    %261 = vmatpush1.msra.mxu0 0.0
    %262 = vmatprep.subr.mxu0 0.0
    %263 = vmatpush1.msra.mxu0 0.0
    %264 = vmatprep.subr.mxu0 0.0
    %265 = vmatpush1.msra.mxu0 0.0
    %266 = vmatprep.subr.mxu0 0.0
    %267 = vmatpush1.msra.mxu0 0.0
    %268 = vmatprep.subr.mxu0 0.0
    %269 = vmatpush1.msra.mxu0 0.0
    %270 = vmatprep.mubr.f32.mxu0 0.0
    %271 = vmatmul.mubr.f32.gmra.mrb[0].mxu0 %v189
    %v272 = vpop.f32.mrb[0].mxu0
    %v273 = vadd.f32 0.0, %v272
    %v274 = vpop.f32.mrb[0].mxu0
    %275 = vdwg.mxu0
    %v276 = vld [vmem:[%s5] sm:$0x1]
    %v278 = vlaneseq
    %v279 = vshrl.u32 %v278, 7
    %v280 = vsub.s32 0, %v279
    %v281 = vrot.slane %v276, %v280
    %283 = vmatprep.subr.mxu0 0.0
    %284 = vmatpush1.msra.mxu0 %v273
    %285 = vmatprep.subr.mxu0 0.0
    %286 = vmatpush1.msra.mxu0 0.0
    %287 = vmatprep.subr.mxu0 0.0
    %288 = vmatpush1.msra.mxu0 0.0
    %289 = vmatprep.subr.mxu0 0.0
    %290 = vmatpush1.msra.mxu0 0.0
    %291 = vmatprep.subr.mxu0 0.0
    %292 = vmatpush1.msra.mxu0 0.0
    %293 = vmatprep.subr.mxu0 0.0
    %294 = vmatpush1.msra.mxu0 0.0
    %295 = vmatprep.subr.mxu0 0.0
    %296 = vmatpush1.msra.mxu0 0.0
    %297 = vmatprep.subr.mxu0 0.0
    %298 = vmatpush1.msra.mxu0 0.0
    %299 = vmatprep.subr.mxu0 0.0
    %300 = vmatpush1.msra.mxu0 0.0
    %301 = vmatprep.subr.mxu0 0.0
    %302 = vmatpush1.msra.mxu0 0.0
    %303 = vmatprep.subr.mxu0 0.0
    %304 = vmatpush1.msra.mxu0 0.0
    %305 = vmatprep.subr.mxu0 0.0
    %306 = vmatpush1.msra.mxu0 0.0
    %307 = vmatprep.subr.mxu0 0.0
    %308 = vmatpush1.msra.mxu0 0.0
    %309 = vmatprep.subr.mxu0 0.0
    %310 = vmatpush1.msra.mxu0 0.0
    %311 = vmatprep.subr.mxu0 0.0
    %312 = vmatpush1.msra.mxu0 0.0
    %313 = vmatprep.subr.mxu0 0.0
    %314 = vmatpush1.msra.mxu0 0.0
    %315 = vmatprep.subr.mxu0 0.0
    %316 = vmatpush1.msra.mxu0 0.0
    %317 = vmatprep.subr.mxu0 0.0
    %318 = vmatpush1.msra.mxu0 0.0
    %319 = vmatprep.subr.mxu0 0.0
    %320 = vmatpush1.msra.mxu0 0.0
    %321 = vmatprep.subr.mxu0 0.0
    %322 = vmatpush1.msra.mxu0 0.0
    %323 = vmatprep.subr.mxu0 0.0
    %324 = vmatpush1.msra.mxu0 0.0
    %325 = vmatprep.subr.mxu0 0.0
    %326 = vmatpush1.msra.mxu0 0.0
    %327 = vmatprep.subr.mxu0 0.0
    %328 = vmatpush1.msra.mxu0 0.0
    %329 = vmatprep.subr.mxu0 0.0
    %330 = vmatpush1.msra.mxu0 0.0
    %331 = vmatprep.subr.mxu0 0.0
    %332 = vmatpush1.msra.mxu0 0.0
    %333 = vmatprep.subr.mxu0 0.0
    %334 = vmatpush1.msra.mxu0 0.0
    %335 = vmatprep.subr.mxu0 0.0
    %336 = vmatpush1.msra.mxu0 0.0
    %337 = vmatprep.subr.mxu0 0.0
    %338 = vmatpush1.msra.mxu0 0.0
    %339 = vmatprep.subr.mxu0 0.0
    %340 = vmatpush1.msra.mxu0 0.0
    %341 = vmatprep.subr.mxu0 0.0
    %342 = vmatpush1.msra.mxu0 0.0
    %343 = vmatprep.subr.mxu0 0.0
    %344 = vmatpush1.msra.mxu0 0.0
    %345 = vmatprep.subr.mxu0 0.0
    %346 = vmatpush1.msra.mxu0 0.0
    %347 = vmatprep.mubr.f32.mxu0 0.0
    %348 = vmatmul.mubr.f32.gmra.mrb[0].mxu0 %v39
    %v349 = vpop.f32.mrb[0].mxu0
    %v350 = vadd.f32 %v281, %v349
    %v351 = vpop.f32.mrb[0].mxu0
    %352 = vdwg.mxu0
    %v353 = vxor.u32 %v350, 2147483648
    %v354 = vmul.f32 %v353, 1.442695
    %v355 = vpow.pop %v354
    %v356 = vadd.f32 %v355, 1.0
    %v357 = vrcp.pop %v356
    %v358 = vmul.f32 1.0, %v357
    %v359 = vld [vmem:[#allocation2] sm:$0xff]
    %v360 = vadd.f32 %v359, %v350
    %vm361 = vcmask 326656
    %362 = vst.msk [vmem:[#allocation2] sm:$0xff] %vm361, %v360
    %v363 = vld [vmem:[#allocation3] sm:$0xff]
    %v364 = vadd.f32 %v363, %v358
    %365 = vst.msk [vmem:[#allocation3] sm:$0xff] %vm361, %v364
    %v366 = vld [vmem:[#allocation4] sm:$0xff]
    %v367 = vmul.f32 %v358, %v358
    %v368 = vadd.f32 %v366, %v367
    %369 = vst.msk [vmem:[#allocation4] sm:$0xff] %vm361, %v368
    // Predicated region
    $region30: #{tpu_custom_call.1} parent=1 // pred_check
      %p370 = pneg %p27
    $region31: #{tpu_custom_call.1} parent=1 // pred_check_branch
      %372 = sbr.rel (%p370) target = $region33
    $region32: #{tpu_custom_call.1} parent=1 // pred_region
      %v373 = vld [vmem:[#allocation2] sm:$0xff]
      %v374 = vld [vmem:[#allocation3] sm:$0xff]
      %v375 = vld [vmem:[#allocation4] sm:$0xff]
      %377 = vrot.lane.b32.xlu0 %v373, 118
      %v378 = vpop.permute.xlu0 %377
      %v380 = vadd.f32 %v373, %v378
      %382 = vrot.lane.b32.xlu0 %v374, 118
      %v383 = vpop.permute.xlu0 %382
      %v385 = vadd.f32 %v374, %v383
      %387 = vrot.lane.b32.xlu0 %v375, 118
      %v388 = vpop.permute.xlu0 %387
      %v390 = vadd.f32 %v375, %v388
      %391 = vrot.lane.b32.xlu0 %v373, 108
      %v392 = vpop.permute.xlu0 %391
      %v394 = vadd.f32 %v380, %v392
      %395 = vrot.lane.b32.xlu0 %v374, 108
      %v396 = vpop.permute.xlu0 %395
      %v398 = vadd.f32 %v385, %v396
      %399 = vrot.lane.b32.xlu0 %v375, 108
      %v400 = vpop.permute.xlu0 %399
      %v402 = vadd.f32 %v390, %v400
      %403 = vrot.lane.b32.xlu0 %v373, 98
      %v404 = vpop.permute.xlu0 %403
      %v406 = vadd.f32 %v394, %v404
      %407 = vrot.lane.b32.xlu0 %v374, 98
      %v408 = vpop.permute.xlu0 %407
      %v410 = vadd.f32 %v398, %v408
      %411 = vrot.lane.b32.xlu0 %v375, 98
      %v412 = vpop.permute.xlu0 %411
      %v414 = vadd.f32 %v402, %v412
      %v415 = vrcp.pop 4.0
      %v416 = vmul.f32 %v406, %v415
      %v417 = vmul.f32 %v410, %v415
      %v418 = vmul.f32 %v417, 4.0
      %v419 = vmul.f32 %v418, %v417
      %v420 = vsub.f32 %v414, %v419
      %v421 = vrcp.pop 3.0
      %v422 = vmul.f32 %v420, %v421
      %v423 = vmax.f32 %v422, 0.0
      %v424 = vrsqrt.pop %v423
      %v425 = vmul.f32 %v423, %v424
      %vm426 = vcmp.eq.f32.partialorder %v423, inf
      %v427 = vsel %vm426, %v423, %v425
      %vm428 = vcmp.eq.f32.partialorder %v423, 0.0
      %v429 = vand.u32 %v423, 2147483648
      %v430 = vsel %vm428, %v429, %v427
      %vm431 = vcmask 80896
      %v432 = vsel %vm431, %v430, 0.0
      %433 = vadd.xlane.f32.xlu0 %v432
      %v434 = vpop.xlane.xlu0 %433
      %v435 = vrcp.pop 10.0
      %v436 = vmul.f32 %v434, %v435
      %437 = vst.msk [vmem:[#allocation7] sm:$0xff] %vm431, %v430
      %v438 = vmul.f32 %v436, 1.442695
      %v439 = vpow.pop %v438
      %v440 = vadd.f32 %v439, 1.0
      %v441 = vrcp.pop %v440
      %v442 = vmul.f32 %v416, %v441
      %443 = vst.msk [vmem:[#allocation5] sm:$0xff] %vm431, %v442
    $region33: #{tpu_custom_call.1} parent=1 // pred_fallthru
      _
    // Predicated region
    $region34: #{tpu_custom_call.1} parent=1 // pred_check
      _
    $region35: #{tpu_custom_call.1} parent=1 // pred_check_branch
      %445 = sbr.rel (0) target = $region37
    $region36: #{tpu_custom_call.1} parent=1 // pred_region
      %s447 = ssub.s32 128, 128
      %448 = vsyncadd [#allocation6], %s447
      %s450 = sshll.u32 [#allocation5], 4
      %s451 = int_to_ptr.vmem [resolvable:$true] %s450
      %453 = dma.vmem_to_hbm [thread:$0]  %s451, 128, %s6, [#allocation6]
    $region37: #{tpu_custom_call.1} parent=1 // pred_fallthru
      _
    // Predicated region
    $region38: #{tpu_custom_call.1} parent=1 // pred_check
      _
    $region39: #{tpu_custom_call.1} parent=1 // pred_check_branch
      %455 = sbr.rel (0) target = $region41
    $region40: #{tpu_custom_call.1} parent=1 // pred_region
      %s457 = ssub.s32 128, 128
      %458 = vsyncadd [#allocation8], %s457
      %s460 = sshll.u32 [#allocation7], 4
      %s461 = int_to_ptr.vmem [resolvable:$true] %s460
      %463 = dma.vmem_to_hbm [thread:$0]  %s461, 128, %s7, [#allocation8]
    $region41: #{tpu_custom_call.1} parent=1 // pred_fallthru
      _
    // Predicated region
    $region42: #{tpu_custom_call.1} parent=1 // pred_check
      _
    $region43: #{tpu_custom_call.1} parent=1 // pred_check_branch
      %465 = sbr.rel (0) target = $region45
    $region44: #{tpu_custom_call.1} parent=1 // pred_region
      %466 = dma.done [#allocation6], 128
    $region45: #{tpu_custom_call.1} parent=1 // pred_fallthru
      _
    // Predicated region
    $region46: #{tpu_custom_call.1} parent=1 // pred_check
      _
    $region47: #{tpu_custom_call.1} parent=1 // pred_check_branch
      %468 = sbr.rel (0) target = $region49
    $region48: #{tpu_custom_call.1} parent=1 // pred_region
      %469 = dma.done [#allocation8], 128
    $region49: #{tpu_custom_call.1} parent=1 // pred_fallthru
      _
    %470 = vsyncpa [#allocation6], 1
    %471 = vsyncpa [#allocation8], 1

</llo_original>
